<compile_context>
chip_gen: v7x
topology: tpu7x:2x2x1
jax: 0.10.0
libtpu: 0.0.40
codegen_flags: <defaults>
</compile_context>

<pallas_src>
import functools

import jax
import jax.numpy as jnp
from jax import lax
from jax.experimental import pallas as pl
from jax.experimental.pallas import tpu as pltpu

IN_FEATURES = 561
HIDDEN = 50
NUM_CLASSES = 6

HIDDEN_PAD = 128        # lane-full hidden slab
CLASS_PAD = 128         # lane-dense output slab
DEFAULT_BLOCK_B = 512   # batch tile (multiple of 8); safe on v5e/v6e/v7x VMEM budgets


def _round_up(x, m):
    return (x + m - 1) // m * m


def mlp_kernel(x_ref, w1_ref, b1_ref, w2_ref, b2_ref, o_ref, *, mxu_dtype):
    # hidden layer: (TB, 561) @ (561, 128) -> f32 accumulate on the MXU
    h = jnp.dot(x_ref[...].astype(mxu_dtype), w1_ref[...].astype(mxu_dtype),
                preferred_element_type=jnp.float32)
    h = jnp.maximum(h + b1_ref[...], 0.0)                       # (TB, 128) f32

    # classification layer: (TB, 128) @ (128, 128) -> f32 accumulate
    logits = jnp.dot(h.astype(mxu_dtype), w2_ref[...].astype(mxu_dtype),
                     preferred_element_type=jnp.float32)
    logits = logits + b2_ref[...]                               # (TB, 128) f32

    # LogSoftmax over the class axis (numerically stable); the padded lanes
    # (col >= NUM_CLASSES) must be excluded from the max / logsumexp.
    col = lax.broadcasted_iota(jnp.int32, logits.shape, 1)
    valid = col < NUM_CLASSES
    masked = jnp.where(valid, logits, -jnp.inf)
    m = jnp.max(masked, axis=1, keepdims=True)
    shifted = masked - m
    lse = jnp.log(jnp.sum(jnp.where(valid, jnp.exp(shifted), 0.0),
                          axis=1, keepdims=True))
    o_ref[...] = jnp.where(valid, shifted - lse, 0.0)           # lane-dense store


def mlp_forward(x, w1p, b1p, w2p, b2p, *, block_b=DEFAULT_BLOCK_B,
                mxu_dtype=jnp.float32):
    """x: (B, 561) f32.  w1p/b1p/w2p/b2p: zero-padded params from pad_params."""
    B, K = x.shape
    assert K == IN_FEATURES
    tb = min(block_b, _round_up(max(B, 1), 8))
    b_pad = _round_up(B, tb)
    if b_pad != B:
        x = jnp.pad(x, ((0, b_pad - B), (0, 0)))   # remainder tile handled by padding

    grid = (b_pad // tb,)
    kernel = functools.partial(mlp_kernel, mxu_dtype=mxu_dtype)

    cost = pl.CostEstimate(
        flops=2 * b_pad * (IN_FEATURES * HIDDEN_PAD + HIDDEN_PAD * CLASS_PAD),
        transcendentals=b_pad * NUM_CLASSES,
        bytes_accessed=4 * (b_pad * IN_FEATURES + IN_FEATURES * HIDDEN_PAD
                            + HIDDEN_PAD * CLASS_PAD + 2 * CLASS_PAD
                            + b_pad * CLASS_PAD),
    )

    out = pl.pallas_call(
        kernel,
        out_shape=jax.ShapeDtypeStruct((b_pad, CLASS_PAD), jnp.float32),
        grid=grid,
        in_specs=[
            pl.BlockSpec((tb, IN_FEATURES), lambda i: (i, 0)),        # x: tiled
            pl.BlockSpec((IN_FEATURES, HIDDEN_PAD), lambda i: (0, 0)),  # W1: resident
            pl.BlockSpec((1, HIDDEN_PAD), lambda i: (0, 0)),            # b1: resident
            pl.BlockSpec((HIDDEN_PAD, CLASS_PAD), lambda i: (0, 0)),    # W2: resident
            pl.BlockSpec((1, CLASS_PAD), lambda i: (0, 0)),             # b2: resident
        ],
        out_specs=pl.BlockSpec((tb, CLASS_PAD), lambda i: (i, 0)),
        compiler_params=pltpu.CompilerParams(
            dimension_semantics=("parallel",),
            vmem_limit_bytes=32 * 1024 * 1024,
        ),
        cost_estimate=cost,
    )(x, w1p, b1p, w2p, b2p)

    return out[:B, :NUM_CLASSES]


def init_params(key):
    """Deterministic init mimicking PyTorch nn.Linear defaults
    (uniform(-1/sqrt(fan_in), 1/sqrt(fan_in)) for weight and bias);
    weights stored as (in, out) so the kernel computes x @ W."""
    k1, k2, k3, k4 = jax.random.split(key, 4)
    bound1 = 1.0 / jnp.sqrt(float(IN_FEATURES))
    bound2 = 1.0 / jnp.sqrt(float(HIDDEN))
    w1 = jax.random.uniform(k1, (IN_FEATURES, HIDDEN), jnp.float32, -bound1, bound1)
    b1 = jax.random.uniform(k2, (HIDDEN,), jnp.float32, -bound1, bound1)
    w2 = jax.random.uniform(k3, (HIDDEN, NUM_CLASSES), jnp.float32, -bound2, bound2)
    b2 = jax.random.uniform(k4, (NUM_CLASSES,), jnp.float32, -bound2, bound2)
    return w1, b1, w2, b2


def pad_params(w1, b1, w2, b2):
    """One-time zero-padding to lane-full shapes (layout plumbing, done once)."""
    w1p = jnp.zeros((IN_FEATURES, HIDDEN_PAD), jnp.float32).at[:, :HIDDEN].set(w1)
    b1p = jnp.zeros((1, HIDDEN_PAD), jnp.float32).at[0, :HIDDEN].set(b1)
    w2p = jnp.zeros((HIDDEN_PAD, CLASS_PAD), jnp.float32).at[:HIDDEN, :NUM_CLASSES].set(w2)
    b2p = jnp.zeros((1, CLASS_PAD), jnp.float32).at[0, :NUM_CLASSES].set(b2)
    return w1p, b1p, w2p, b2p


def reference_forward(x, w1, b1, w2, b2):
    h = jnp.maximum(jnp.dot(x, w1, precision=lax.Precision.HIGHEST) + b1, 0.0)
    logits = jnp.dot(h, w2, precision=lax.Precision.HIGHEST) + b2
    return jax.nn.log_softmax(logits, axis=1)


if __name__ == "__main__":
    key = jax.random.PRNGKey(0)
    kx, kp, kx2 = jax.random.split(key, 3)

    w1, b1, w2, b2 = init_params(kp)
    padded = pad_params(w1, b1, w2, b2)

    # Small batch (single tile), f32 MXU feed -- tight check vs pure-JAX reference.
    B = 8
    x = jax.random.normal(kx, (B, IN_FEATURES), jnp.float32)
    out = jax.block_until_ready(mlp_forward(x, *padded))
    ref = reference_forward(x, w1, b1, w2, b2)
    assert out.shape == (B, NUM_CLASSES)
    assert jnp.allclose(out, ref, atol=1e-5, rtol=1e-5), "f32 mismatch vs reference"
    assert jnp.allclose(jnp.sum(jnp.exp(out), axis=1), 1.0, atol=1e-5)

    # Larger batch exercising the pipelined grid (multiple tiles + remainder pad).
    B2 = 600
    x2 = jax.random.normal(kx2, (B2, IN_FEATURES), jnp.float32)
    out2 = jax.block_until_ready(mlp_forward(x2, *padded, block_b=256))
    ref2 = reference_forward(x2, w1, b1, w2, b2)
    assert out2.shape == (B2, NUM_CLASSES)
    assert jnp.allclose(out2, ref2, atol=1e-4, rtol=1e-4), "tiled f32 mismatch"
    assert jnp.allclose(jnp.sum(jnp.exp(out2), axis=1), 1.0, atol=1e-4)

    # bf16 MXU-feed variant (the v6e/v7x perf path); elementwise math stays f32.
    out_bf16 = jax.block_until_ready(
        mlp_forward(x2, *padded, block_b=256, mxu_dtype=jnp.bfloat16))
    assert jnp.allclose(out_bf16, ref2, atol=5e-2, rtol=5e-2), "bf16 mismatch"

    print("KERNEL_OK")
</pallas_src>

<mosaic_0001>
module attributes {stable_mosaic.version = 11 : i64} {
  func.func @mlp_kernel(%arg0: i32, %arg1: memref<8x561xf32, #tpu.memory_space<vmem>>, %arg2: memref<561x128xf32, #tpu.memory_space<vmem>>, %arg3: memref<1x128xf32, #tpu.memory_space<vmem>>, %arg4: memref<128x128xf32, #tpu.memory_space<vmem>>, %arg5: memref<1x128xf32, #tpu.memory_space<vmem>>, %arg6: memref<8x128xf32, #tpu.memory_space<vmem>>) attributes {dimension_semantics = [#tpu.dimension_semantics<parallel>], iteration_bounds = array<i64: 1>, scalar_prefetch = 0 : i64, scratch_operands = 0 : i64, tpu.core_type = #tpu.core_type<tc>, window_params = [{transform_indices = @transform_0, window_bounds = array<i64: 8, 561>}, {pipeline_mode = #tpu.pipeline_mode<synchronous>, transform_indices = @transform_1, window_bounds = array<i64: 561, 128>}, {pipeline_mode = #tpu.pipeline_mode<synchronous>, transform_indices = @transform_2, window_bounds = array<i64: 1, 128>}, {pipeline_mode = #tpu.pipeline_mode<synchronous>, transform_indices = @transform_3, window_bounds = array<i64: 128, 128>}, {pipeline_mode = #tpu.pipeline_mode<synchronous>, transform_indices = @transform_4, window_bounds = array<i64: 1, 128>}, {transform_indices = @transform_5, window_bounds = array<i64: 8, 128>}]} {
    %c0 = arith.constant 0 : index
    %c0_0 = arith.constant 0 : index
    %0 = vector.load %arg1[%c0, %c0_0] : memref<8x561xf32, #tpu.memory_space<vmem>>, vector<8x561xf32>
    %c0_1 = arith.constant 0 : index
    %c0_2 = arith.constant 0 : index
    %1 = vector.load %arg2[%c0_1, %c0_2] : memref<561x128xf32, #tpu.memory_space<vmem>>, vector<561x128xf32>
    %cst = arith.constant dense<0.000000e+00> : vector<8x128xf32>
    %2 = tpu.matmul %0, %1, %cst {dimension_numbers = #tpu.dot_dimension_numbers<[1], [0], [0], [1], [0, 0, 1, 1], [], []>} : vector<8x561xf32>, vector<561x128xf32>, vector<8x128xf32> -> vector<8x128xf32>
    %c0_3 = arith.constant 0 : index
    %c0_4 = arith.constant 0 : index
    %3 = vector.load %arg3[%c0_3, %c0_4] : memref<1x128xf32, #tpu.memory_space<vmem>>, vector<1x128xf32>
    %4 = vector.broadcast %3 : vector<1x128xf32> to vector<8x128xf32>
    %5 = arith.addf %2, %4 : vector<8x128xf32>
    %cst_5 = arith.constant 0.000000e+00 : f32
    %6 = vector.broadcast %cst_5 : f32 to vector<8x128xf32>
    %7 = arith.maximumf %5, %6 : vector<8x128xf32>
    %c0_6 = arith.constant 0 : index
    %c0_7 = arith.constant 0 : index
    %8 = vector.load %arg4[%c0_6, %c0_7] : memref<128x128xf32, #tpu.memory_space<vmem>>, vector<128x128xf32>
    %cst_8 = arith.constant dense<0.000000e+00> : vector<8x128xf32>
    %9 = tpu.matmul %7, %8, %cst_8 {dimension_numbers = #tpu.dot_dimension_numbers<[1], [0], [0], [1], [0, 0, 1, 1], [], []>} : vector<8x128xf32>, vector<128x128xf32>, vector<8x128xf32> -> vector<8x128xf32>
    %c0_9 = arith.constant 0 : index
    %c0_10 = arith.constant 0 : index
    %10 = vector.load %arg5[%c0_9, %c0_10] : memref<1x128xf32, #tpu.memory_space<vmem>>, vector<1x128xf32>
    %11 = vector.broadcast %10 : vector<1x128xf32> to vector<8x128xf32>
    %12 = arith.addf %9, %11 : vector<8x128xf32>
    %13 = tpu.iota {dimensions = array<i32: 1>} : vector<8x128xi32>
    %c6_i32 = arith.constant 6 : i32
    %14 = vector.broadcast %c6_i32 : i32 to vector<8x128xi32>
    %15 = arith.cmpi slt, %13, %14 : vector<8x128xi32>
    %cst_11 = arith.constant 0xFF800000 : f32
    %16 = vector.broadcast %cst_11 : f32 to vector<8x128xf32>
    %17 = arith.select %15, %12, %16 : vector<8x128xi1>, vector<8x128xf32>
    %cst_12 = arith.constant dense<0xFF800000> : vector<8xf32>
    %18 = vector.multi_reduction <maximumf>, %17, %cst_12 [1] : vector<8x128xf32> to vector<8xf32>
    %19 = vector.shape_cast %18 : vector<8xf32> to vector<8x1xf32>
    %20 = vector.broadcast %19 : vector<8x1xf32> to vector<8x128xf32>
    %21 = arith.subf %17, %20 : vector<8x128xf32>
    %22 = math.exp %21 : vector<8x128xf32>
    %cst_13 = arith.constant 0.000000e+00 : f32
    %23 = vector.broadcast %cst_13 : f32 to vector<8x128xf32>
    %24 = arith.select %15, %22, %23 : vector<8x128xi1>, vector<8x128xf32>
    %cst_14 = arith.constant dense<0.000000e+00> : vector<8xf32>
    %25 = vector.multi_reduction <add>, %24, %cst_14 [1] : vector<8x128xf32> to vector<8xf32>
    %26 = vector.shape_cast %25 : vector<8xf32> to vector<8x1xf32>
    %27 = math.log %26 : vector<8x1xf32>
    %28 = vector.broadcast %27 : vector<8x1xf32> to vector<8x128xf32>
    %29 = arith.subf %21, %28 : vector<8x128xf32>
    %cst_15 = arith.constant 0.000000e+00 : f32
    %30 = vector.broadcast %cst_15 : f32 to vector<8x128xf32>
    %31 = arith.select %15, %29, %30 : vector<8x128xi1>, vector<8x128xf32>
    %c0_16 = arith.constant 0 : index
    %c0_17 = arith.constant 0 : index
    %32 = vector.load %arg6[%c0_16, %c0_17] : memref<8x128xf32, #tpu.memory_space<vmem>>, vector<8x128xf32>
    tpu.vector_store %arg6[%c0_16, %c0_17], %31 {strides = array<i32>} : memref<8x128xf32, #tpu.memory_space<vmem>>, vector<8x128xf32>,
    return
  }
  func.func @transform_0(%arg0: i32) -> (i32, i32) {
    %c0_i32 = arith.constant 0 : i32
    %c0_i32_0 = arith.constant 0 : i32
    return %arg0, %c0_i32 : i32, i32
  }
  func.func @transform_1(%arg0: i32) -> (i32, i32) {
    %c0_i32 = arith.constant 0 : i32
    %c0_i32_0 = arith.constant 0 : i32
    %c0_i32_1 = arith.constant 0 : i32
    return %c0_i32, %c0_i32_0 : i32, i32
  }
  func.func @transform_2(%arg0: i32) -> (i32, i32) {
    %c0_i32 = arith.constant 0 : i32
    %c0_i32_0 = arith.constant 0 : i32
    %c0_i32_1 = arith.constant 0 : i32
    return %c0_i32, %c0_i32_0 : i32, i32
  }
  func.func @transform_3(%arg0: i32) -> (i32, i32) {
    %c0_i32 = arith.constant 0 : i32
    %c0_i32_0 = arith.constant 0 : i32
    %c0_i32_1 = arith.constant 0 : i32
    return %c0_i32, %c0_i32_0 : i32, i32
  }
  func.func @transform_4(%arg0: i32) -> (i32, i32) {
    %c0_i32 = arith.constant 0 : i32
    %c0_i32_0 = arith.constant 0 : i32
    %c0_i32_1 = arith.constant 0 : i32
    return %c0_i32, %c0_i32_0 : i32, i32
  }
  func.func @transform_5(%arg0: i32) -> (i32, i32) {
    %c0_i32 = arith.constant 0 : i32
    %c0_i32_0 = arith.constant 0 : i32
    return %arg0, %c0_i32 : i32, i32
  }
}

</mosaic_0001>

<llo_original>
// kernel: tpu_custom_call.1
$region0: #{tpu_custom_call.1}
  #allocation0 [shape = 'u32[]', space=smem, size = 0x4, offset = 0x4, fixed_abs, tag = 'smem constant byte address 0x4 - core index']
  #allocation1 [shape = 'u32[144,128]{1,0:T(1,128)}', space=vmem, size = 0x12000, scoped, tag = 'internal scratch']
  %s0 = inlined_call_operand.hbm [shape: f32[8,561], index: 0, kind: input, shape index: {}]
  %s1 = inlined_call_operand.hbm [shape: f32[561,128], index: 1, kind: input, shape index: {}]
  %s2 = inlined_call_operand.vmem [shape: f32[1,128], index: 2, kind: input, shape index: {}]
  %s3 = inlined_call_operand.hbm [shape: f32[128,128], index: 3, kind: input, shape index: {}]
  %s4 = inlined_call_operand.vmem [shape: f32[1,128], index: 4, kind: input, shape index: {}]
  %s5 = inlined_call_operand.hbm [shape: f32[8,128], index: 5, kind: output, shape index: {}]
  %s6 = sld [smem:[#allocation0]]
  $region42: #{tpu_custom_call.1} parent=0
    _
  %s8 = ssub.s32 1, %s6
  %s9 = scalar_select 0, %s8, %s6
  $region1: #{tpu_custom_call.1} parent=0
    #allocation2 [shape = 'u8[20480]{0}', space=vmem, size = 0x5000, scoped, tag = 'input window, operand 0, single buffered']
    #allocation3 [shape = 's32[1]{0}', space=sflag, size = 0x4, scoped, tag = 'scoped memory for tpu_custom_call.1']
    #allocation4 [shape = 's32[1]{0}', space=sflag, size = 0x4, scoped, tag = 'scoped memory for tpu_custom_call.1']
    #allocation5 [shape = 'u8[290816]{0}', space=vmem, size = 0x47000, scoped, tag = 'input window, operand 1, single buffered']
    #allocation6 [shape = 's32[1]{0}', space=sflag, size = 0x4, scoped, tag = 'scoped memory for tpu_custom_call.1']
    #allocation7 [shape = 'u8[65536]{0}', space=vmem, size = 0x10000, scoped, tag = 'input window, operand 3, single buffered']
    #allocation8 [shape = 'u8[4096]{0}', space=vmem, size = 0x1000, scoped, tag = 'output window, operand 0, single buffered']
    %10 = vsyncpa [#allocation3], 0
    %11 = vsyncpa [#allocation6], 0
    %12 = vsyncpa [#allocation4], 0
    // Predicated region
    $region2: #{tpu_custom_call.1} parent=1 // pred_check
      _
    $region3: #{tpu_custom_call.1} parent=1 // pred_check_branch
      %14 = sbr.rel (0) target = $region5
    $region4: #{tpu_custom_call.1} parent=1 // pred_region
      %s16 = ssub.s32 640, 640
      %17 = vsyncadd [#allocation3], %s16
      %s19 = sshll.u32 [#allocation2], 4
      %s20 = int_to_ptr.vmem [resolvable:$true] %s19
      %22 = dma.hbm_to_vmem [thread:$0]  %s0, 640, %s20, [#allocation3]
    $region5: #{tpu_custom_call.1} parent=1 // pred_fallthru
      _
    // Predicated region
    $region6: #{tpu_custom_call.1} parent=1 // pred_check
      _
    $region7: #{tpu_custom_call.1} parent=1 // pred_check_branch
      %24 = sbr.rel (0) target = $region9
    $region8: #{tpu_custom_call.1} parent=1 // pred_region
      %s26 = ssub.s32 9088, 9088
      %27 = vsyncadd [#allocation6], %s26
      %s28 = sshll.u32 [#allocation5], 4
      %s29 = int_to_ptr.vmem [resolvable:$true] %s28
      %34 = dma.hbm_to_vmem [thread:$0]  %s1, 9088, %s29, [#allocation6], 128, 128, 8
    $region9: #{tpu_custom_call.1} parent=1 // pred_fallthru
      _
    // Predicated region
    $region10: #{tpu_custom_call.1} parent=1 // pred_check
      _
    $region11: #{tpu_custom_call.1} parent=1 // pred_check_branch
      %36 = sbr.rel (0) target = $region13
    $region12: #{tpu_custom_call.1} parent=1 // pred_region
      _
    $region13: #{tpu_custom_call.1} parent=1 // pred_fallthru
      _
    // Predicated region
    $region14: #{tpu_custom_call.1} parent=1 // pred_check
      _
    $region15: #{tpu_custom_call.1} parent=1 // pred_check_branch
      %38 = sbr.rel (0) target = $region17
    $region16: #{tpu_custom_call.1} parent=1 // pred_region
      %s40 = ssub.s32 2048, 2048
      %41 = vsyncadd [#allocation6], %s40
      %s42 = sshll.u32 [#allocation7], 4
      %s43 = int_to_ptr.vmem [resolvable:$true] %s42
      %48 = dma.hbm_to_vmem [thread:$0]  %s3, 2048, %s43, [#allocation6], 128, 128, 8
    $region17: #{tpu_custom_call.1} parent=1 // pred_fallthru
      _
    // Predicated region
    $region18: #{tpu_custom_call.1} parent=1 // pred_check
      _
    $region19: #{tpu_custom_call.1} parent=1 // pred_check_branch
      %50 = sbr.rel (0) target = $region21
    $region20: #{tpu_custom_call.1} parent=1 // pred_region
      _
    $region21: #{tpu_custom_call.1} parent=1 // pred_fallthru
      _
    // Predicated region
    $region22: #{tpu_custom_call.1} parent=1 // pred_check
      _
    $region23: #{tpu_custom_call.1} parent=1 // pred_check_branch
      %52 = sbr.rel (0) target = $region25
    $region24: #{tpu_custom_call.1} parent=1 // pred_region
      %53 = dma.done [#allocation3], 640
    $region25: #{tpu_custom_call.1} parent=1 // pred_fallthru
      _
    // Predicated region
    $region26: #{tpu_custom_call.1} parent=1 // pred_check
      _
    $region27: #{tpu_custom_call.1} parent=1 // pred_check_branch
      %55 = sbr.rel (0) target = $region29
    $region28: #{tpu_custom_call.1} parent=1 // pred_region
      %56 = dma.done [#allocation6], 9088
    $region29: #{tpu_custom_call.1} parent=1 // pred_fallthru
      _
    // Predicated region
    $region30: #{tpu_custom_call.1} parent=1 // pred_check
      _
    $region31: #{tpu_custom_call.1} parent=1 // pred_check_branch
      %58 = sbr.rel (0) target = $region33
    $region32: #{tpu_custom_call.1} parent=1 // pred_region
      %59 = dma.done [#allocation6], 2048
    $region33: #{tpu_custom_call.1} parent=1 // pred_fallthru
      _
    %v60 = vld [vmem:[#allocation2] sm:$0xff]
    %v61 = vld [vmem:[#allocation2 + $0x8] sm:$0xff]
    %v62 = vld [vmem:[#allocation2 + $0x10] sm:$0xff]
    %v63 = vld [vmem:[#allocation2 + $0x18] sm:$0xff]
    %v64 = vld [vmem:[#allocation2 + $0x20] sm:$0xff]
    %v65 = vld [vmem:[#allocation5] sm:$0xff]
    %v66 = vld [vmem:[#allocation5 + $0x8] sm:$0xff]
    %v67 = vld [vmem:[#allocation5 + $0x10] sm:$0xff]
    %v68 = vld [vmem:[#allocation5 + $0x18] sm:$0xff]
    %v69 = vld [vmem:[#allocation5 + $0x20] sm:$0xff]
    %v70 = vld [vmem:[#allocation5 + $0x28] sm:$0xff]
    %v71 = vld [vmem:[#allocation5 + $0x30] sm:$0xff]
    %v72 = vld [vmem:[#allocation5 + $0x38] sm:$0xff]
    %v73 = vld [vmem:[#allocation5 + $0x40] sm:$0xff]
    %v74 = vld [vmem:[#allocation5 + $0x48] sm:$0xff]
    %v75 = vld [vmem:[#allocation5 + $0x50] sm:$0xff]
    %v76 = vld [vmem:[#allocation5 + $0x58] sm:$0xff]
    %v77 = vld [vmem:[#allocation5 + $0x60] sm:$0xff]
    %v78 = vld [vmem:[#allocation5 + $0x68] sm:$0xff]
    %v79 = vld [vmem:[#allocation5 + $0x70] sm:$0xff]
    %v80 = vld [vmem:[#allocation5 + $0x78] sm:$0xff]
    %v81 = vld [vmem:[#allocation5 + $0x80] sm:$0xff]
    %v82 = vld [vmem:[#allocation5 + $0x88] sm:$0xff]
    %v83 = vld [vmem:[#allocation5 + $0x90] sm:$0xff]
    %v84 = vld [vmem:[#allocation5 + $0x98] sm:$0xff]
    %v85 = vld [vmem:[#allocation5 + $0xa0] sm:$0xff]
    %v86 = vld [vmem:[#allocation5 + $0xa8] sm:$0xff]
    %v87 = vld [vmem:[#allocation5 + $0xb0] sm:$0xff]
    %v88 = vld [vmem:[#allocation5 + $0xb8] sm:$0xff]
    %v89 = vld [vmem:[#allocation5 + $0xc0] sm:$0xff]
    %v90 = vld [vmem:[#allocation5 + $0xc8] sm:$0xff]
    %v91 = vld [vmem:[#allocation5 + $0xd0] sm:$0xff]
    %v92 = vld [vmem:[#allocation5 + $0xd8] sm:$0xff]
    %v93 = vld [vmem:[#allocation5 + $0xe0] sm:$0xff]
    %v94 = vld [vmem:[#allocation5 + $0xe8] sm:$0xff]
    %v95 = vld [vmem:[#allocation5 + $0xf0] sm:$0xff]
    %v96 = vld [vmem:[#allocation5 + $0xf8] sm:$0xff]
    %v97 = vld [vmem:[#allocation5 + $0x100] sm:$0xff]
    %v98 = vld [vmem:[#allocation5 + $0x108] sm:$0xff]
    %v99 = vld [vmem:[#allocation5 + $0x110] sm:$0xff]
    %v100 = vld [vmem:[#allocation5 + $0x118] sm:$0xff]
    %v101 = vld [vmem:[#allocation5 + $0x120] sm:$0xff]
    %v102 = vld [vmem:[#allocation5 + $0x128] sm:$0xff]
    %v103 = vld [vmem:[#allocation5 + $0x130] sm:$0xff]
    %v104 = vld [vmem:[#allocation5 + $0x138] sm:$0xff]
    %v105 = vld [vmem:[#allocation5 + $0x140] sm:$0xff]
    %v106 = vld [vmem:[#allocation5 + $0x148] sm:$0xff]
    %v107 = vld [vmem:[#allocation5 + $0x150] sm:$0xff]
    %v108 = vld [vmem:[#allocation5 + $0x158] sm:$0xff]
    %v109 = vld [vmem:[#allocation5 + $0x160] sm:$0xff]
    %v110 = vld [vmem:[#allocation5 + $0x168] sm:$0xff]
    %v111 = vld [vmem:[#allocation5 + $0x170] sm:$0xff]
    %v112 = vld [vmem:[#allocation5 + $0x178] sm:$0xff]
    %v113 = vld [vmem:[#allocation5 + $0x180] sm:$0xff]
    %v114 = vld [vmem:[#allocation5 + $0x188] sm:$0xff]
    %v115 = vld [vmem:[#allocation5 + $0x190] sm:$0xff]
    %v116 = vld [vmem:[#allocation5 + $0x198] sm:$0xff]
    %v117 = vld [vmem:[#allocation5 + $0x1a0] sm:$0xff]
    %v118 = vld [vmem:[#allocation5 + $0x1a8] sm:$0xff]
    %v119 = vld [vmem:[#allocation5 + $0x1b0] sm:$0xff]
    %v120 = vld [vmem:[#allocation5 + $0x1b8] sm:$0xff]
    %v121 = vld [vmem:[#allocation5 + $0x1c0] sm:$0xff]
    %v122 = vld [vmem:[#allocation5 + $0x1c8] sm:$0xff]
    %v123 = vld [vmem:[#allocation5 + $0x1d0] sm:$0xff]
    %v124 = vld [vmem:[#allocation5 + $0x1d8] sm:$0xff]
    %v125 = vld [vmem:[#allocation5 + $0x1e0] sm:$0xff]
    %v126 = vld [vmem:[#allocation5 + $0x1e8] sm:$0xff]
    %v127 = vld [vmem:[#allocation5 + $0x1f0] sm:$0xff]
    %v128 = vld [vmem:[#allocation5 + $0x1f8] sm:$0xff]
    %v129 = vld [vmem:[#allocation5 + $0x200] sm:$0xff]
    %v130 = vld [vmem:[#allocation5 + $0x208] sm:$0xff]
    %v131 = vld [vmem:[#allocation5 + $0x210] sm:$0xff]
    %v132 = vld [vmem:[#allocation5 + $0x218] sm:$0xff]
    %v133 = vld [vmem:[#allocation5 + $0x220] sm:$0xff]
    %v134 = vld [vmem:[#allocation5 + $0x228] sm:$0xff]
    %v135 = vld [vmem:[#allocation5 + $0x230] sm:$0x1]
    %v136 = vld [vmem:[%s2] sm:$0x1]
    %v138 = vlaneseq
    %v139 = vshrl.u32 %v138, 7
    %v140 = vsub.s32 0, %v139
    %v141 = vrot.slane %v136, %v140
    %vm143 = vcmask 400384
    %v145 = vsel %vm143, %v64, 0
    %vm147 = vcmask 1040384
    %v149 = vsel %vm147, %v135, 0
    %151 = vmatprep.subr.mxu0 0.0
    %152 = vmatpush1.msra.mxu0 %v65
    %153 = vmatprep.subr.mxu0 0.0
    %154 = vmatpush1.msra.mxu0 %v66
    %155 = vmatprep.subr.mxu0 0.0
    %156 = vmatpush1.msra.mxu0 %v67
    %157 = vmatprep.subr.mxu0 0.0
    %158 = vmatpush1.msra.mxu0 %v68
    %159 = vmatprep.subr.mxu0 0.0
    %160 = vmatpush1.msra.mxu0 %v69
    %161 = vmatprep.subr.mxu0 0.0
    %162 = vmatpush1.msra.mxu0 %v70
    %163 = vmatprep.subr.mxu0 0.0
    %164 = vmatpush1.msra.mxu0 %v71
    %165 = vmatprep.subr.mxu0 0.0
    %166 = vmatpush1.msra.mxu0 %v72
    %167 = vmatprep.subr.mxu0 0.0
    %168 = vmatpush1.msra.mxu0 %v73
    %169 = vmatprep.subr.mxu0 0.0
    %170 = vmatpush1.msra.mxu0 %v74
    %171 = vmatprep.subr.mxu0 0.0
    %172 = vmatpush1.msra.mxu0 %v75
    %173 = vmatprep.subr.mxu0 0.0
    %174 = vmatpush1.msra.mxu0 %v76
    %175 = vmatprep.subr.mxu0 0.0
    %176 = vmatpush1.msra.mxu0 %v77
    %177 = vmatprep.subr.mxu0 0.0
    %178 = vmatpush1.msra.mxu0 %v78
    %179 = vmatprep.subr.mxu0 0.0
    %180 = vmatpush1.msra.mxu0 %v79
    %181 = vmatprep.subr.mxu0 0.0
    %182 = vmatpush1.msra.mxu0 %v80
    %183 = vmatprep.subr.mxu0 0.0
    %184 = vmatpush1.msra.mxu0 %v81
    %185 = vmatprep.subr.mxu0 0.0
    %186 = vmatpush1.msra.mxu0 %v82
    %187 = vmatprep.subr.mxu0 0.0
    %188 = vmatpush1.msra.mxu0 %v83
    %189 = vmatprep.subr.mxu0 0.0
    %190 = vmatpush1.msra.mxu0 %v84
    %191 = vmatprep.subr.mxu0 0.0
    %192 = vmatpush1.msra.mxu0 %v85
    %193 = vmatprep.subr.mxu0 0.0
    %194 = vmatpush1.msra.mxu0 %v86
    %195 = vmatprep.subr.mxu0 0.0
    %196 = vmatpush1.msra.mxu0 %v87
    %197 = vmatprep.subr.mxu0 0.0
    %198 = vmatpush1.msra.mxu0 %v88
    %199 = vmatprep.subr.mxu0 0.0
    %200 = vmatpush1.msra.mxu0 %v89
    %201 = vmatprep.subr.mxu0 0.0
    %202 = vmatpush1.msra.mxu0 %v90
    %203 = vmatprep.subr.mxu0 0.0
    %204 = vmatpush1.msra.mxu0 %v91
    %205 = vmatprep.subr.mxu0 0.0
    %206 = vmatpush1.msra.mxu0 %v92
    %207 = vmatprep.subr.mxu0 0.0
    %208 = vmatpush1.msra.mxu0 %v93
    %209 = vmatprep.subr.mxu0 0.0
    %210 = vmatpush1.msra.mxu0 %v94
    %211 = vmatprep.subr.mxu0 0.0
    %212 = vmatpush1.msra.mxu0 %v95
    %213 = vmatprep.subr.mxu0 0.0
    %214 = vmatpush1.msra.mxu0 %v96
    %215 = vmatprep.mubr.f32.mxu0 %v61
    %216 = vmatmul.mubr.f32.gmra.mrb[0].mxu0 %v60
    %v217 = vpop.f32.mrb[0].mxu0
    %v218 = vadd.f32 %v141, %v217
    %v219 = vpop.f32.mrb[0].mxu0
    %220 = vdwg.mxu0
    %221 = vmatprep.subr.mxu0 0.0
    %222 = vmatpush1.msra.mxu0 %v97
    %223 = vmatprep.subr.mxu0 0.0
    %224 = vmatpush1.msra.mxu0 %v98
    %225 = vmatprep.subr.mxu0 0.0
    %226 = vmatpush1.msra.mxu0 %v99
    %227 = vmatprep.subr.mxu0 0.0
    %228 = vmatpush1.msra.mxu0 %v100
    %229 = vmatprep.subr.mxu0 0.0
    %230 = vmatpush1.msra.mxu0 %v101
    %231 = vmatprep.subr.mxu0 0.0
    %232 = vmatpush1.msra.mxu0 %v102
    %233 = vmatprep.subr.mxu0 0.0
    %234 = vmatpush1.msra.mxu0 %v103
    %235 = vmatprep.subr.mxu0 0.0
    %236 = vmatpush1.msra.mxu0 %v104
    %237 = vmatprep.subr.mxu0 0.0
    %238 = vmatpush1.msra.mxu0 %v105
    %239 = vmatprep.subr.mxu0 0.0
    %240 = vmatpush1.msra.mxu0 %v106
    %241 = vmatprep.subr.mxu0 0.0
    %242 = vmatpush1.msra.mxu0 %v107
    %243 = vmatprep.subr.mxu0 0.0
    %244 = vmatpush1.msra.mxu0 %v108
    %245 = vmatprep.subr.mxu0 0.0
    %246 = vmatpush1.msra.mxu0 %v109
    %247 = vmatprep.subr.mxu0 0.0
    %248 = vmatpush1.msra.mxu0 %v110
    %249 = vmatprep.subr.mxu0 0.0
    %250 = vmatpush1.msra.mxu0 %v111
    %251 = vmatprep.subr.mxu0 0.0
    %252 = vmatpush1.msra.mxu0 %v112
    %253 = vmatprep.subr.mxu0 0.0
    %254 = vmatpush1.msra.mxu0 %v113
    %255 = vmatprep.subr.mxu0 0.0
    %256 = vmatpush1.msra.mxu0 %v114
    %257 = vmatprep.subr.mxu0 0.0
    %258 = vmatpush1.msra.mxu0 %v115
    %259 = vmatprep.subr.mxu0 0.0
    %260 = vmatpush1.msra.mxu0 %v116
    %261 = vmatprep.subr.mxu0 0.0
    %262 = vmatpush1.msra.mxu0 %v117
    %263 = vmatprep.subr.mxu0 0.0
    %264 = vmatpush1.msra.mxu0 %v118
    %265 = vmatprep.subr.mxu0 0.0
    %266 = vmatpush1.msra.mxu0 %v119
    %267 = vmatprep.subr.mxu0 0.0
    %268 = vmatpush1.msra.mxu0 %v120
    %269 = vmatprep.subr.mxu0 0.0
    %270 = vmatpush1.msra.mxu0 %v121
    %271 = vmatprep.subr.mxu0 0.0
    %272 = vmatpush1.msra.mxu0 %v122
    %273 = vmatprep.subr.mxu0 0.0
    %274 = vmatpush1.msra.mxu0 %v123
    %275 = vmatprep.subr.mxu0 0.0
    %276 = vmatpush1.msra.mxu0 %v124
    %277 = vmatprep.subr.mxu0 0.0
    %278 = vmatpush1.msra.mxu0 %v125
    %279 = vmatprep.subr.mxu0 0.0
    %280 = vmatpush1.msra.mxu0 %v126
    %281 = vmatprep.subr.mxu0 0.0
    %282 = vmatpush1.msra.mxu0 %v127
    %283 = vmatprep.subr.mxu0 0.0
    %284 = vmatpush1.msra.mxu0 %v128
    %285 = vmatprep.mubr.f32.mxu0 %v63
    %286 = vmatmul.mubr.f32.gmra.mrb[0].mxu0 %v62
    %v287 = vpop.f32.mrb[0].mxu0
    %v288 = vadd.f32 %v218, %v287
    %v289 = vpop.f32.mrb[0].mxu0
    %290 = vdwg.mxu0
    %291 = vmatprep.subr.mxu0 0.0
    %292 = vmatpush1.msra.mxu0 %v129
    %293 = vmatprep.subr.mxu0 0.0
    %294 = vmatpush1.msra.mxu0 %v130
    %295 = vmatprep.subr.mxu0 0.0
    %296 = vmatpush1.msra.mxu0 %v131
    %297 = vmatprep.subr.mxu0 0.0
    %298 = vmatpush1.msra.mxu0 %v132
    %299 = vmatprep.subr.mxu0 0.0
    %300 = vmatpush1.msra.mxu0 %v133
    %301 = vmatprep.subr.mxu0 0.0
    %302 = vmatpush1.msra.mxu0 %v134
    %303 = vmatprep.subr.mxu0 0.0
    %304 = vmatpush1.msra.mxu0 %v149
    %305 = vmatprep.subr.mxu0 0.0
    %306 = vmatpush1.msra.mxu0 0.0
    %307 = vmatprep.subr.mxu0 0.0
    %308 = vmatpush1.msra.mxu0 0.0
    %309 = vmatprep.subr.mxu0 0.0
    %310 = vmatpush1.msra.mxu0 0.0
    %311 = vmatprep.subr.mxu0 0.0
    %312 = vmatpush1.msra.mxu0 0.0
    %313 = vmatprep.subr.mxu0 0.0
    %314 = vmatpush1.msra.mxu0 0.0
    %315 = vmatprep.subr.mxu0 0.0
    %316 = vmatpush1.msra.mxu0 0.0
    %317 = vmatprep.subr.mxu0 0.0
    %318 = vmatpush1.msra.mxu0 0.0
    %319 = vmatprep.subr.mxu0 0.0
    %320 = vmatpush1.msra.mxu0 0.0
    %321 = vmatprep.subr.mxu0 0.0
    %322 = vmatpush1.msra.mxu0 0.0
    %323 = vmatprep.subr.mxu0 0.0
    %324 = vmatpush1.msra.mxu0 0.0
    %325 = vmatprep.subr.mxu0 0.0
    %326 = vmatpush1.msra.mxu0 0.0
    %327 = vmatprep.subr.mxu0 0.0
    %328 = vmatpush1.msra.mxu0 0.0
    %329 = vmatprep.subr.mxu0 0.0
    %330 = vmatpush1.msra.mxu0 0.0
    %331 = vmatprep.subr.mxu0 0.0
    %332 = vmatpush1.msra.mxu0 0.0
    %333 = vmatprep.subr.mxu0 0.0
    %334 = vmatpush1.msra.mxu0 0.0
    %335 = vmatprep.subr.mxu0 0.0
    %336 = vmatpush1.msra.mxu0 0.0
    %337 = vmatprep.subr.mxu0 0.0
    %338 = vmatpush1.msra.mxu0 0.0
    %339 = vmatprep.subr.mxu0 0.0
    %340 = vmatpush1.msra.mxu0 0.0
    %341 = vmatprep.subr.mxu0 0.0
    %342 = vmatpush1.msra.mxu0 0.0
    %343 = vmatprep.subr.mxu0 0.0
    %344 = vmatpush1.msra.mxu0 0.0
    %345 = vmatprep.subr.mxu0 0.0
    %346 = vmatpush1.msra.mxu0 0.0
    %347 = vmatprep.subr.mxu0 0.0
    %348 = vmatpush1.msra.mxu0 0.0
    %349 = vmatprep.subr.mxu0 0.0
    %350 = vmatpush1.msra.mxu0 0.0
    %351 = vmatprep.subr.mxu0 0.0
    %352 = vmatpush1.msra.mxu0 0.0
    %353 = vmatprep.subr.mxu0 0.0
    %354 = vmatpush1.msra.mxu0 0.0
    %355 = vmatprep.mubr.f32.mxu0 0.0
    %356 = vmatmul.mubr.f32.gmra.mrb[0].mxu0 %v145
    %v357 = vpop.f32.mrb[0].mxu0
    %v358 = vadd.f32 %v288, %v357
    %v359 = vpop.f32.mrb[0].mxu0
    %360 = vdwg.mxu0
    %v361 = vmax.f32 %v358, 0.0
    %v362 = vld [vmem:[#allocation7] sm:$0xff]
    %v363 = vld [vmem:[#allocation7 + $0x8] sm:$0xff]
    %v364 = vld [vmem:[#allocation7 + $0x10] sm:$0xff]
    %v365 = vld [vmem:[#allocation7 + $0x18] sm:$0xff]
    %v366 = vld [vmem:[#allocation7 + $0x20] sm:$0xff]
    %v367 = vld [vmem:[#allocation7 + $0x28] sm:$0xff]
    %v368 = vld [vmem:[#allocation7 + $0x30] sm:$0xff]
    %v369 = vld [vmem:[#allocation7 + $0x38] sm:$0xff]
    %v370 = vld [vmem:[#allocation7 + $0x40] sm:$0xff]
    %v371 = vld [vmem:[#allocation7 + $0x48] sm:$0xff]
    %v372 = vld [vmem:[#allocation7 + $0x50] sm:$0xff]
    %v373 = vld [vmem:[#allocation7 + $0x58] sm:$0xff]
    %v374 = vld [vmem:[#allocation7 + $0x60] sm:$0xff]
    %v375 = vld [vmem:[#allocation7 + $0x68] sm:$0xff]
    %v376 = vld [vmem:[#allocation7 + $0x70] sm:$0xff]
    %v377 = vld [vmem:[#allocation7 + $0x78] sm:$0xff]
    %v378 = vld [vmem:[%s4] sm:$0x1]
    %v380 = vlaneseq
    %v381 = vshrl.u32 %v380, 7
    %v382 = vsub.s32 0, %v381
    %v383 = vrot.slane %v378, %v382
    %385 = vmatprep.subr.mxu0 0.0
    %386 = vmatpush1.msra.mxu0 %v362
    %387 = vmatprep.subr.mxu0 0.0
    %388 = vmatpush1.msra.mxu0 %v363
    %389 = vmatprep.subr.mxu0 0.0
    %390 = vmatpush1.msra.mxu0 %v364
    %391 = vmatprep.subr.mxu0 0.0
    %392 = vmatpush1.msra.mxu0 %v365
    %393 = vmatprep.subr.mxu0 0.0
    %394 = vmatpush1.msra.mxu0 %v366
    %395 = vmatprep.subr.mxu0 0.0
    %396 = vmatpush1.msra.mxu0 %v367
    %397 = vmatprep.subr.mxu0 0.0
    %398 = vmatpush1.msra.mxu0 %v368
    %399 = vmatprep.subr.mxu0 0.0
    %400 = vmatpush1.msra.mxu0 %v369
    %401 = vmatprep.subr.mxu0 0.0
    %402 = vmatpush1.msra.mxu0 %v370
    %403 = vmatprep.subr.mxu0 0.0
    %404 = vmatpush1.msra.mxu0 %v371
    %405 = vmatprep.subr.mxu0 0.0
    %406 = vmatpush1.msra.mxu0 %v372
    %407 = vmatprep.subr.mxu0 0.0
    %408 = vmatpush1.msra.mxu0 %v373
    %409 = vmatprep.subr.mxu0 0.0
    %410 = vmatpush1.msra.mxu0 %v374
    %411 = vmatprep.subr.mxu0 0.0
    %412 = vmatpush1.msra.mxu0 %v375
    %413 = vmatprep.subr.mxu0 0.0
    %414 = vmatpush1.msra.mxu0 %v376
    %415 = vmatprep.subr.mxu0 0.0
    %416 = vmatpush1.msra.mxu0 %v377
    %417 = vmatprep.subr.mxu0 0.0
    %418 = vmatpush1.msra.mxu0 0.0
    %419 = vmatprep.subr.mxu0 0.0
    %420 = vmatpush1.msra.mxu0 0.0
    %421 = vmatprep.subr.mxu0 0.0
    %422 = vmatpush1.msra.mxu0 0.0
    %423 = vmatprep.subr.mxu0 0.0
    %424 = vmatpush1.msra.mxu0 0.0
    %425 = vmatprep.subr.mxu0 0.0
    %426 = vmatpush1.msra.mxu0 0.0
    %427 = vmatprep.subr.mxu0 0.0
    %428 = vmatpush1.msra.mxu0 0.0
    %429 = vmatprep.subr.mxu0 0.0
    %430 = vmatpush1.msra.mxu0 0.0
    %431 = vmatprep.subr.mxu0 0.0
    %432 = vmatpush1.msra.mxu0 0.0
    %433 = vmatprep.subr.mxu0 0.0
    %434 = vmatpush1.msra.mxu0 0.0
    %435 = vmatprep.subr.mxu0 0.0
    %436 = vmatpush1.msra.mxu0 0.0
    %437 = vmatprep.subr.mxu0 0.0
    %438 = vmatpush1.msra.mxu0 0.0
    %439 = vmatprep.subr.mxu0 0.0
    %440 = vmatpush1.msra.mxu0 0.0
    %441 = vmatprep.subr.mxu0 0.0
    %442 = vmatpush1.msra.mxu0 0.0
    %443 = vmatprep.subr.mxu0 0.0
    %444 = vmatpush1.msra.mxu0 0.0
    %445 = vmatprep.subr.mxu0 0.0
    %446 = vmatpush1.msra.mxu0 0.0
    %447 = vmatprep.subr.mxu0 0.0
    %448 = vmatpush1.msra.mxu0 0.0
    %449 = vmatprep.mubr.f32.mxu0 0.0
    %450 = vmatmul.mubr.f32.gmra.mrb[0].mxu0 %v361
    %v451 = vpop.f32.mrb[0].mxu0
    %v452 = vadd.f32 %v383, %v451
    %v453 = vpop.f32.mrb[0].mxu0
    %454 = vdwg.mxu0
    %v455 = vlaneseq
    %v456 = vand.u32 %v455, 127
    %vm457 = vcmp.lt.s32.totalorder %v456, 6
    %v458 = vsel %vm457, %v452, -inf
    %459 = vmax.xlane.f32.xlu0 %v458
    %v460 = vpop.xlane.xlu0 %459
    %v461 = vsub.f32 %v458, %v460
    %v462 = vmul.f32 %v461, 1.442695
    %v463 = vpow.pop %v462
    %v464 = vsel %vm457, %v463, 0.0
    %465 = vadd.xlane.f32.xlu0 %v464
    %v466 = vpop.xlane.xlu0 %465
    %v467 = vlog2.pop %v466
    %v468 = vmul.f32 %v467, 0.6931472
    %v469 = vsub.f32 %v461, %v468
    %v470 = vsel %vm457, %v469, 0.0
    %471 = vst [vmem:[#allocation8] sm:$0xff] %v470
    // Predicated region
    $region34: #{tpu_custom_call.1} parent=1 // pred_check
      _
    $region35: #{tpu_custom_call.1} parent=1 // pred_check_branch
      %473 = sbr.rel (0) target = $region37
    $region36: #{tpu_custom_call.1} parent=1 // pred_region
      %s475 = ssub.s32 128, 128
      %476 = vsyncadd [#allocation4], %s475
      %s478 = sshll.u32 [#allocation8], 4
      %s479 = int_to_ptr.vmem [resolvable:$true] %s478
      %481 = dma.vmem_to_hbm [thread:$0]  %s479, 128, %s5, [#allocation4]
    $region37: #{tpu_custom_call.1} parent=1 // pred_fallthru
      _
    // Predicated region
    $region38: #{tpu_custom_call.1} parent=1 // pred_check
      _
    $region39: #{tpu_custom_call.1} parent=1 // pred_check_branch
      %483 = sbr.rel (0) target = $region41
    $region40: #{tpu_custom_call.1} parent=1 // pred_region
      %484 = dma.done [#allocation4], 128
    $region41: #{tpu_custom_call.1} parent=1 // pred_fallthru
      _
    %485 = vsyncpa [#allocation3], 1
    %486 = vsyncpa [#allocation6], 1
    %487 = vsyncpa [#allocation4], 1

</llo_original>
